<compile_context>
chip_gen: v7x
topology: tpu7x:2x2x1
jax: 0.10.0
libtpu: 0.0.40
codegen_flags: <defaults>
</compile_context>

<pallas_src>
import jax
import jax.numpy as jnp
from jax.experimental import pallas as pl
from jax.experimental.pallas import tpu as pltpu

_LANE = 128  # lane granule (last dim)
_SUB = 8     # sublane granule (second-to-last dim, f32)


def _round_up(x, m):
    return ((x + m - 1) // m) * m


def _mlp_kernel(x_ref, w1_ref, b1_ref, w2_ref, b2_ref, o_ref):
    # First linear: x @ W1, bf16 operands, f32 accumulation on the MXU.
    x = x_ref[...].astype(w1_ref.dtype)
    h = jnp.dot(x, w1_ref[...], preferred_element_type=jnp.float32)
    # Bias add + ReLU in f32 (keeps the VPU path native on v5e).
    h = jnp.maximum(h + b1_ref[...], 0.0)
    # Second linear: cast the activation back to the MXU compute dtype.
    out = jnp.dot(h.astype(w2_ref.dtype), w2_ref[...],
                  preferred_element_type=jnp.float32)
    o_ref[...] = (out + b2_ref[...]).astype(o_ref.dtype)


def prepare_params(w1, b1, w2, b2, *, compute_dtype=jnp.bfloat16):
    """One-time conversion of PyTorch-layout Linear params to kernel layout.

    PyTorch nn.Linear stores W as [out_features, in_features]; the kernel wants
    [in, out].  Streamed dims (input features, output features) are kept at
    their real width (input only rounded to the 8-sublane granule); the
    VMEM-resident hidden dim is lane-padded to 128 — exact, since padded
    hidden units have zero weights and zero bias.

    Note: bf16 weight storage loses a little precision vs the f32 torch module
    (intentional — MXU compute dtype).
    """
    hid, in_f = w1.shape
    out_f = w2.shape[0]
    in_p = _round_up(in_f, _SUB)      # streamed: sublane granule only
    hid_p = _round_up(hid, _LANE)     # VMEM-resident: lane-pad (cheap, exact)

    w1_t = jnp.zeros((in_p, hid_p), compute_dtype).at[:in_f, :hid].set(
        jnp.transpose(w1).astype(compute_dtype))
    w2_t = jnp.zeros((hid_p, out_f), compute_dtype).at[:hid, :].set(
        jnp.transpose(w2).astype(compute_dtype))
    b1_p = jnp.zeros((1, hid_p), jnp.float32).at[:, :hid].set(
        b1.astype(jnp.float32).reshape(1, hid))
    b2_p = b2.astype(jnp.float32).reshape(1, out_f)
    return (w1_t, b1_p, w2_t, b2_p)


def network_forward(x, kernel_params, *, block_b=1024):
    """Forward pass.  x: [B, input_size] f32.  Returns [B, output_size] f32."""
    w1_t, b1_p, w2_t, b2_p = kernel_params
    B, in_f = x.shape
    in_p, hid_p = w1_t.shape
    out_f = w2_t.shape[1]

    # Batch padded only to the sublane granule (waste bounded to < 8 rows).
    b_pad = _round_up(B, _SUB)

    # Batch tile: multiple of 8 (robustness vs. arbitrary block_b), large by
    # default (fewer ~0.35 us grid steps), but capped so the grid keeps >= 2
    # steps once the batch is big enough — the "parallel" axis then shards
    # across both v7x TensorCores (costs nothing on 1-TC v5e/v6e).
    block_b = max(_SUB, _round_up(block_b, _SUB))
    tb = min(block_b, b_pad)
    if b_pad > 256:
        tb = min(tb, max(256, _round_up((b_pad + 1) // 2, _SUB)))
    grid = (pl.cdiv(b_pad, tb),)

    # Pad only when actually needed (avoid extra HBM passes in the wrapper).
    if b_pad != B or in_p != in_f:
        x = jnp.pad(x, ((0, b_pad - B), (0, in_p - in_f)))

    bytes_c = jnp.dtype(w1_t.dtype).itemsize
    flops = 2 * b_pad * (in_p * hid_p + hid_p * out_f)
    bytes_accessed = (
        b_pad * in_p * x.dtype.itemsize
        + in_p * hid_p * bytes_c + hid_p * out_f * bytes_c
        + (hid_p + out_f) * 4
        + b_pad * out_f * 4
    )

    out_padded = pl.pallas_call(
        _mlp_kernel,
        out_shape=jax.ShapeDtypeStruct((b_pad, out_f), jnp.float32),
        grid=grid,
        in_specs=[
            pl.BlockSpec((tb, in_p), lambda i: (i, 0)),      # x: tiled over batch
            pl.BlockSpec((in_p, hid_p), lambda i: (0, 0)),   # W1: VMEM-resident
            pl.BlockSpec((1, hid_p), lambda i: (0, 0)),      # b1
            pl.BlockSpec((hid_p, out_f), lambda i: (0, 0)),  # W2: VMEM-resident
            pl.BlockSpec((1, out_f), lambda i: (0, 0)),      # b2
        ],
        out_specs=pl.BlockSpec((tb, out_f), lambda i: (i, 0)),
        compiler_params=pltpu.CompilerParams(
            dimension_semantics=("parallel",),
        ),
        cost_estimate=pl.CostEstimate(
            flops=flops, transcendentals=0, bytes_accessed=bytes_accessed),
    )(x, w1_t, b1_p, w2_t, b2_p)

    # NOTE: if hidden_size ever grows beyond what fits VMEM, add a K-grid over
    # the hidden dim with a f32 VMEM accumulator + pl.when init/finalize
    # (axis marked "arbitrary").  Not needed at these sizes.
    return out_padded if b_pad == B else out_padded[:B]


def init_params(key, input_size, hidden_size, output_size):
    """Deterministic init mimicking torch.nn.Linear default U(-1/sqrt(fan_in), +)."""
    k1, k2, k3, k4 = jax.random.split(key, 4)
    bound1 = 1.0 / jnp.sqrt(input_size)
    bound2 = 1.0 / jnp.sqrt(hidden_size)
    w1 = jax.random.uniform(k1, (hidden_size, input_size), jnp.float32, -bound1, bound1)
    b1 = jax.random.uniform(k2, (hidden_size,), jnp.float32, -bound1, bound1)
    w2 = jax.random.uniform(k3, (output_size, hidden_size), jnp.float32, -bound2, bound2)
    b2 = jax.random.uniform(k4, (output_size,), jnp.float32, -bound2, bound2)
    return w1, b1, w2, b2


if __name__ == "__main__":
    # Small shapes consistent with the module (Linear -> ReLU -> Linear).
    batch = 2
    input_size = 16
    hidden_size = 32
    output_size = 4

    key = jax.random.PRNGKey(0)
    k_x, k_p = jax.random.split(key)
    x = jax.random.normal(k_x, (batch, input_size), dtype=jnp.float32)
    w1, b1, w2, b2 = init_params(k_p, input_size, hidden_size, output_size)

    # One-time parameter repack (transpose + hidden pad + bf16 cast) -- NOT per call.
    kparams = prepare_params(w1, b1, w2, b2, compute_dtype=jnp.bfloat16)

    out = network_forward(x, kparams)
    out = jax.block_until_ready(out)

    # Reference in plain f32 JAX (same semantics as the PyTorch forward).
    ref = jnp.maximum(x @ w1.T + b1, 0.0) @ w2.T + b2
    assert out.shape == (batch, output_size)
    # bf16 MXU operands => relax tolerance vs the f32 reference.
    assert jnp.allclose(out, ref, atol=5e-2, rtol=5e-2), (
        f"max abs err {jnp.max(jnp.abs(out - ref))}")

    print("KERNEL_OK")
</pallas_src>

<mosaic_0001>
module attributes {stable_mosaic.version = 11 : i64} {
  func.func @_mlp_kernel(%arg0: i32, %arg1: memref<8x16xf32, #tpu.memory_space<vmem>>, %arg2: memref<16x128xbf16, #tpu.memory_space<vmem>>, %arg3: memref<1x128xf32, #tpu.memory_space<vmem>>, %arg4: memref<128x4xbf16, #tpu.memory_space<vmem>>, %arg5: memref<1x4xf32, #tpu.memory_space<vmem>>, %arg6: memref<8x4xf32, #tpu.memory_space<vmem>>) attributes {dimension_semantics = [#tpu.dimension_semantics<parallel>], iteration_bounds = array<i64: 1>, scalar_prefetch = 0 : i64, scratch_operands = 0 : i64, tpu.core_type = #tpu.core_type<tc>, window_params = [{transform_indices = @transform_0, window_bounds = array<i64: 8, 16>}, {pipeline_mode = #tpu.pipeline_mode<synchronous>, transform_indices = @transform_1, window_bounds = array<i64: 16, 128>}, {pipeline_mode = #tpu.pipeline_mode<synchronous>, transform_indices = @transform_2, window_bounds = array<i64: 1, 128>}, {pipeline_mode = #tpu.pipeline_mode<synchronous>, transform_indices = @transform_3, window_bounds = array<i64: 128, 4>}, {pipeline_mode = #tpu.pipeline_mode<synchronous>, transform_indices = @transform_4, window_bounds = array<i64: 1, 4>}, {transform_indices = @transform_5, window_bounds = array<i64: 8, 4>}]} {
    %c0 = arith.constant 0 : index
    %c0_0 = arith.constant 0 : index
    %0 = vector.load %arg1[%c0, %c0_0] : memref<8x16xf32, #tpu.memory_space<vmem>>, vector<8x16xf32>
    %1 = arith.truncf %0 : vector<8x16xf32> to vector<8x16xbf16>
    %c0_1 = arith.constant 0 : index
    %c0_2 = arith.constant 0 : index
    %2 = vector.load %arg2[%c0_1, %c0_2] : memref<16x128xbf16, #tpu.memory_space<vmem>>, vector<16x128xbf16>
    %cst = arith.constant dense<0.000000e+00> : vector<8x128xf32>
    %3 = tpu.matmul %1, %2, %cst {dimension_numbers = #tpu.dot_dimension_numbers<[1], [0], [0], [1], [0, 0, 1, 1], [], []>} : vector<8x16xbf16>, vector<16x128xbf16>, vector<8x128xf32> -> vector<8x128xf32>
    %c0_3 = arith.constant 0 : index
    %c0_4 = arith.constant 0 : index
    %4 = vector.load %arg3[%c0_3, %c0_4] : memref<1x128xf32, #tpu.memory_space<vmem>>, vector<1x128xf32>
    %5 = vector.broadcast %4 : vector<1x128xf32> to vector<8x128xf32>
    %6 = arith.addf %3, %5 : vector<8x128xf32>
    %cst_5 = arith.constant 0.000000e+00 : f32
    %7 = vector.broadcast %cst_5 : f32 to vector<8x128xf32>
    %8 = arith.maximumf %6, %7 : vector<8x128xf32>
    %9 = arith.truncf %8 : vector<8x128xf32> to vector<8x128xbf16>
    %c0_6 = arith.constant 0 : index
    %c0_7 = arith.constant 0 : index
    %10 = vector.load %arg4[%c0_6, %c0_7] : memref<128x4xbf16, #tpu.memory_space<vmem>>, vector<128x4xbf16>
    %cst_8 = arith.constant dense<0.000000e+00> : vector<8x4xf32>
    %11 = tpu.matmul %9, %10, %cst_8 {dimension_numbers = #tpu.dot_dimension_numbers<[1], [0], [0], [1], [0, 0, 1, 1], [], []>} : vector<8x128xbf16>, vector<128x4xbf16>, vector<8x4xf32> -> vector<8x4xf32>
    %c0_9 = arith.constant 0 : index
    %c0_10 = arith.constant 0 : index
    %12 = vector.load %arg5[%c0_9, %c0_10] : memref<1x4xf32, #tpu.memory_space<vmem>>, vector<1x4xf32>
    %13 = vector.broadcast %12 : vector<1x4xf32> to vector<8x4xf32>
    %14 = arith.addf %11, %13 : vector<8x4xf32>
    %c0_11 = arith.constant 0 : index
    %c0_12 = arith.constant 0 : index
    %15 = vector.load %arg6[%c0_11, %c0_12] : memref<8x4xf32, #tpu.memory_space<vmem>>, vector<8x4xf32>
    tpu.vector_store %arg6[%c0_11, %c0_12], %14 {strides = array<i32>} : memref<8x4xf32, #tpu.memory_space<vmem>>, vector<8x4xf32>,
    return
  }
  func.func @transform_0(%arg0: i32) -> (i32, i32) {
    %c0_i32 = arith.constant 0 : i32
    %c0_i32_0 = arith.constant 0 : i32
    return %arg0, %c0_i32 : i32, i32
  }
  func.func @transform_1(%arg0: i32) -> (i32, i32) {
    %c0_i32 = arith.constant 0 : i32
    %c0_i32_0 = arith.constant 0 : i32
    %c0_i32_1 = arith.constant 0 : i32
    return %c0_i32, %c0_i32_0 : i32, i32
  }
  func.func @transform_2(%arg0: i32) -> (i32, i32) {
    %c0_i32 = arith.constant 0 : i32
    %c0_i32_0 = arith.constant 0 : i32
    %c0_i32_1 = arith.constant 0 : i32
    return %c0_i32, %c0_i32_0 : i32, i32
  }
  func.func @transform_3(%arg0: i32) -> (i32, i32) {
    %c0_i32 = arith.constant 0 : i32
    %c0_i32_0 = arith.constant 0 : i32
    %c0_i32_1 = arith.constant 0 : i32
    return %c0_i32, %c0_i32_0 : i32, i32
  }
  func.func @transform_4(%arg0: i32) -> (i32, i32) {
    %c0_i32 = arith.constant 0 : i32
    %c0_i32_0 = arith.constant 0 : i32
    %c0_i32_1 = arith.constant 0 : i32
    return %c0_i32, %c0_i32_0 : i32, i32
  }
  func.func @transform_5(%arg0: i32) -> (i32, i32) {
    %c0_i32 = arith.constant 0 : i32
    %c0_i32_0 = arith.constant 0 : i32
    return %arg0, %c0_i32 : i32, i32
  }
}

</mosaic_0001>

<llo_original>
// kernel: tpu_custom_call.1
$region0: #{tpu_custom_call.1}
  #allocation0 [shape = 'u32[]', space=smem, size = 0x4, offset = 0x4, fixed_abs, tag = 'smem constant byte address 0x4 - core index']
  #allocation1 [shape = 'u32[144,128]{1,0:T(1,128)}', space=vmem, size = 0x12000, scoped, tag = 'internal scratch']
  %s0 = inlined_call_operand.vmem [shape: f32[8,16], index: 0, kind: input, shape index: {}]
  %s1 = inlined_call_operand.vmem [shape: bf16[16,128], index: 1, kind: input, shape index: {}]
  %s2 = inlined_call_operand.vmem [shape: f32[1,128], index: 2, kind: input, shape index: {}]
  %s3 = inlined_call_operand.vmem [shape: bf16[128,4], index: 3, kind: input, shape index: {}]
  %s4 = inlined_call_operand.vmem [shape: f32[1,4], index: 4, kind: input, shape index: {}]
  %s5 = inlined_call_operand.vmem [shape: f32[8,4], index: 5, kind: output, shape index: {}]
  %s6 = sld [smem:[#allocation0]]
  $region30: #{tpu_custom_call.1} parent=0
    _
  %s8 = ssub.s32 1, %s6
  %s9 = scalar_select 0, %s8, %s6
  // Predicated region
  $region2: #{tpu_custom_call.1} parent=0 // pred_check
    _
  $region3: #{tpu_custom_call.1} parent=0 // pred_check_branch
    %11 = sbr.rel (0) target = $region5
  $region4: #{tpu_custom_call.1} parent=0 // pred_region
    _
  $region5: #{tpu_custom_call.1} parent=0 // pred_fallthru
    _
  // Predicated region
  $region6: #{tpu_custom_call.1} parent=0 // pred_check
    _
  $region7: #{tpu_custom_call.1} parent=0 // pred_check_branch
    %13 = sbr.rel (0) target = $region9
  $region8: #{tpu_custom_call.1} parent=0 // pred_region
    _
  $region9: #{tpu_custom_call.1} parent=0 // pred_fallthru
    _
  // Predicated region
  $region10: #{tpu_custom_call.1} parent=0 // pred_check
    _
  $region11: #{tpu_custom_call.1} parent=0 // pred_check_branch
    %15 = sbr.rel (0) target = $region13
  $region12: #{tpu_custom_call.1} parent=0 // pred_region
    _
  $region13: #{tpu_custom_call.1} parent=0 // pred_fallthru
    _
  // Predicated region
  $region14: #{tpu_custom_call.1} parent=0 // pred_check
    _
  $region15: #{tpu_custom_call.1} parent=0 // pred_check_branch
    %17 = sbr.rel (0) target = $region17
  $region16: #{tpu_custom_call.1} parent=0 // pred_region
    _
  $region17: #{tpu_custom_call.1} parent=0 // pred_fallthru
    _
  // Predicated region
  $region18: #{tpu_custom_call.1} parent=0 // pred_check
    _
  $region19: #{tpu_custom_call.1} parent=0 // pred_check_branch
    %19 = sbr.rel (0) target = $region21
  $region20: #{tpu_custom_call.1} parent=0 // pred_region
    _
  $region21: #{tpu_custom_call.1} parent=0 // pred_fallthru
    _
  %v21 = vld [vmem:[%s0] sm:$0xff]
  %v22 = vpack.c.bf16 %v21, %v21
  %v23 = vld [vmem:[%s1] sm:$0xf]
  %v24 = vld [vmem:[%s1 + $0x4] sm:$0xf]
  %v25 = vld [vmem:[%s2] sm:$0x1]
  %v27 = vlaneseq
  %v28 = vshrl.u32 %v27, 7
  %v29 = vsub.s32 0, %v28
  %v30 = vrot.slane %v25, %v29
  %v34 = vunpack.c.l.b16 %v23
  %v35 = vunpack.c.l.b16 %v24
  %v36 = vpack.c.b16 %v35, %v34
  %vm38 = vcmask 130048
  %v40 = vsel %vm38, %v22, 0
  %42 = vmatprep.subr.bf16.mxu0 0
  %43 = vmatpush1.bf16.msra.mxu0 %v36
  %44 = vmatprep.subr.bf16.mxu0 0
  %45 = vmatpush1.bf16.msra.mxu0 0
  %46 = vmatprep.subr.bf16.mxu0 0
  %47 = vmatpush1.bf16.msra.mxu0 0
  %48 = vmatprep.subr.bf16.mxu0 0
  %49 = vmatpush1.bf16.msra.mxu0 0
  %50 = vmatprep.subr.bf16.mxu0 0
  %51 = vmatpush1.bf16.msra.mxu0 0
  %52 = vmatprep.subr.bf16.mxu0 0
  %53 = vmatpush1.bf16.msra.mxu0 0
  %54 = vmatprep.subr.bf16.mxu0 0
  %55 = vmatpush1.bf16.msra.mxu0 0
  %56 = vmatprep.subr.bf16.mxu0 0
  %57 = vmatpush1.bf16.msra.mxu0 0
  %58 = vmatprep.subr.bf16.mxu0 0
  %59 = vmatpush1.bf16.msra.mxu0 0
  %60 = vmatprep.subr.bf16.mxu0 0
  %61 = vmatpush1.bf16.msra.mxu0 0
  %62 = vmatprep.subr.bf16.mxu0 0
  %63 = vmatpush1.bf16.msra.mxu0 0
  %64 = vmatprep.subr.bf16.mxu0 0
  %65 = vmatpush1.bf16.msra.mxu0 0
  %66 = vmatprep.subr.bf16.mxu0 0
  %67 = vmatpush1.bf16.msra.mxu0 0
  %68 = vmatprep.subr.bf16.mxu0 0
  %69 = vmatpush1.bf16.msra.mxu0 0
  %70 = vmatprep.subr.bf16.mxu0 0
  %71 = vmatpush1.bf16.msra.mxu0 0
  %72 = vmatprep.subr.bf16.mxu0 0
  %73 = vmatpush1.bf16.msra.mxu0 0
  %74 = vmatprep.mubr.bf16.mxu0 0
  %75 = vmatmul.mubr.bf16.gmra.mrb[0].mxu0 %v40
  %v76 = vpop.f32.mrb[0].mxu0
  %v77 = vadd.f32 %v30, %v76
  %v78 = vpop.f32.mrb[0].mxu0
  %v79 = vpop.f32.mrb[0].mxu0
  %v80 = vpop.f32.mrb[0].mxu0
  %81 = vdwg.mxu0
  %v82 = vmax.f32 %v77, 0.0
  %v83 = vpack.c.bf16 %v82, %v82
  %v84 = vld [vmem:[%s3] sm:$0xf]
  %v85 = vld [vmem:[%s3 + $0x4] sm:$0xf]
  %v86 = vld [vmem:[%s3 + $0x8] sm:$0xf]
  %v87 = vld [vmem:[%s3 + $0xc] sm:$0xf]
  %v88 = vld [vmem:[%s3 + $0x10] sm:$0xf]
  %v89 = vld [vmem:[%s3 + $0x14] sm:$0xf]
  %v90 = vld [vmem:[%s3 + $0x18] sm:$0xf]
  %v91 = vld [vmem:[%s3 + $0x1c] sm:$0xf]
  %v92 = vld [vmem:[%s3 + $0x20] sm:$0xf]
  %v93 = vld [vmem:[%s3 + $0x24] sm:$0xf]
  %v94 = vld [vmem:[%s3 + $0x28] sm:$0xf]
  %v95 = vld [vmem:[%s3 + $0x2c] sm:$0xf]
  %v96 = vld [vmem:[%s3 + $0x30] sm:$0xf]
  %v97 = vld [vmem:[%s3 + $0x34] sm:$0xf]
  %v98 = vld [vmem:[%s3 + $0x38] sm:$0xf]
  %v99 = vld [vmem:[%s3 + $0x3c] sm:$0xf]
  %v100 = vld [vmem:[%s4] sm:$0x1]
  %v102 = vlaneseq
  %v103 = vshrl.u32 %v102, 7
  %v104 = vsub.s32 0, %v103
  %v105 = vrot.slane %v100, %v104
  %v123 = vunpack.c.l.b16 %v84
  %v124 = vunpack.c.l.b16 %v85
  %v125 = vunpack.c.l.b16 %v86
  %v126 = vunpack.c.l.b16 %v87
  %v127 = vunpack.c.l.b16 %v88
  %v128 = vunpack.c.l.b16 %v89
  %v129 = vunpack.c.l.b16 %v90
  %v130 = vunpack.c.l.b16 %v91
  %v131 = vunpack.c.l.b16 %v92
  %v132 = vunpack.c.l.b16 %v93
  %v133 = vunpack.c.l.b16 %v94
  %v134 = vunpack.c.l.b16 %v95
  %v135 = vunpack.c.l.b16 %v96
  %v136 = vunpack.c.l.b16 %v97
  %v137 = vunpack.c.l.b16 %v98
  %v138 = vunpack.c.l.b16 %v99
  %v139 = vpack.c.b16 %v124, %v123
  %v140 = vpack.c.b16 %v126, %v125
  %v141 = vpack.c.b16 %v128, %v127
  %v142 = vpack.c.b16 %v130, %v129
  %v143 = vpack.c.b16 %v132, %v131
  %v144 = vpack.c.b16 %v134, %v133
  %v145 = vpack.c.b16 %v136, %v135
  %v146 = vpack.c.b16 %v138, %v137
  %155 = vmatprep.subr.bf16.mxu0 0
  %156 = vmatpush1.bf16.msra.mxu0 %v139
  %157 = vmatprep.subr.bf16.mxu0 0
  %158 = vmatpush1.bf16.msra.mxu0 %v140
  %159 = vmatprep.subr.bf16.mxu0 0
  %160 = vmatpush1.bf16.msra.mxu0 %v141
  %161 = vmatprep.subr.bf16.mxu0 0
  %162 = vmatpush1.bf16.msra.mxu0 %v142
  %163 = vmatprep.subr.bf16.mxu0 0
  %164 = vmatpush1.bf16.msra.mxu0 %v143
  %165 = vmatprep.subr.bf16.mxu0 0
  %166 = vmatpush1.bf16.msra.mxu0 %v144
  %167 = vmatprep.subr.bf16.mxu0 0
  %168 = vmatpush1.bf16.msra.mxu0 %v145
  %169 = vmatprep.subr.bf16.mxu0 0
  %170 = vmatpush1.bf16.msra.mxu0 %v146
  %171 = vmatprep.subr.bf16.mxu0 0
  %172 = vmatpush1.bf16.msra.mxu0 0
  %173 = vmatprep.subr.bf16.mxu0 0
  %174 = vmatpush1.bf16.msra.mxu0 0
  %175 = vmatprep.subr.bf16.mxu0 0
  %176 = vmatpush1.bf16.msra.mxu0 0
  %177 = vmatprep.subr.bf16.mxu0 0
  %178 = vmatpush1.bf16.msra.mxu0 0
  %179 = vmatprep.subr.bf16.mxu0 0
  %180 = vmatpush1.bf16.msra.mxu0 0
  %181 = vmatprep.subr.bf16.mxu0 0
  %182 = vmatpush1.bf16.msra.mxu0 0
  %183 = vmatprep.subr.bf16.mxu0 0
  %184 = vmatpush1.bf16.msra.mxu0 0
  %185 = vmatprep.subr.bf16.mxu0 0
  %186 = vmatpush1.bf16.msra.mxu0 0
  %187 = vmatprep.mubr.bf16.mxu0 0
  %188 = vmatmul.mubr.bf16.gmra.mrb[0].mxu0 %v83
  %v189 = vpop.f32.mrb[0].mxu0
  %v190 = vadd.f32 %v105, %v189
  %v191 = vpop.f32.mrb[0].mxu0
  %v192 = vpop.f32.mrb[0].mxu0
  %v193 = vpop.f32.mrb[0].mxu0
  %194 = vdwg.mxu0
  %vm195 = vcmask 31744
  %196 = vst.msk [vmem:[%s5] sm:$0xff] %vm195, %v190
  // Predicated region
  $region22: #{tpu_custom_call.1} parent=0 // pred_check
    _
  $region23: #{tpu_custom_call.1} parent=0 // pred_check_branch
    %198 = sbr.rel (0) target = $region25
  $region24: #{tpu_custom_call.1} parent=0 // pred_region
    _
  $region25: #{tpu_custom_call.1} parent=0 // pred_fallthru
    _
  // Predicated region
  $region26: #{tpu_custom_call.1} parent=0 // pred_check
    _
  $region27: #{tpu_custom_call.1} parent=0 // pred_check_branch
    %200 = sbr.rel (0) target = $region29
  $region28: #{tpu_custom_call.1} parent=0 // pred_region
    _
  $region29: #{tpu_custom_call.1} parent=0 // pred_fallthru
    _

</llo_original>
